<compile_context>
chip_gen: v7x
topology: tpu7x:2x2x1
jax: 0.10.0
libtpu: 0.0.40
codegen_flags: <defaults>
</compile_context>

<pallas_src>
import functools

import jax
import jax.numpy as jnp
from jax import lax
from jax.experimental import pallas as pl
from jax.experimental.pallas import tpu as pltpu

LANES = 128                        # vreg lane width
SUBLANES = 8                       # vreg sublane width (f32)
TILE_BYTES = 4 * 1024 * 1024       # per-input DMA budget per grid step
VMEM_LIMIT_BYTES = 32 * 1024 * 1024  # 2 inputs x 2 bufs x 4 MiB = 16 MiB used


def _mae_kernel(yt_ref, yp_ref, o_ref, *, block_rows, acc_rows, rows,
                num_blocks, blocks_per_core):
    c = pl.program_id(0)                 # core-chunk axis ("parallel")
    i = pl.program_id(1)                 # streaming reduction axis ("arbitrary")
    blk = c * blocks_per_core + i        # logical (unclamped) block id
    last = num_blocks - 1
    folds = block_rows // acc_rows

    # Output block (1, acc_rows, 128) stays resident across the reduction axis:
    # it is the vector accumulator (no per-step cross-lane XLU reduce).
    @pl.when(i == 0)
    def _init():
        o_ref[...] = jnp.zeros_like(o_ref)

    def fold_and_accumulate(absdiff_f32):
        # (block_rows, 128) -> (acc_rows, 128) with VPU adds only; the leading
        # reshape only splits the sublane-major axis (relayout-free) and the
        # acc_rows-wide accumulator gives acc_rows/8 independent add chains.
        if folds > 1:
            p = absdiff_f32.reshape(folds, acc_rows, LANES).sum(axis=0)
        else:
            p = absdiff_f32
        o_ref[...] += p[jnp.newaxis]

    # Interior blocks: fast path, no mask work at all.
    @pl.when(blk < last)
    def _interior():
        d = jnp.abs(yt_ref[...] - yp_ref[...]).astype(jnp.float32)
        fold_and_accumulate(d)

    # Last real block: row-only tail mask (lane alignment guaranteed by the
    # wrapper; wrapper zero-pad rows contribute 0 even unmasked).
    @pl.when(blk == last)
    def _tail():
        base_row = blk * block_rows
        row_ids = lax.broadcasted_iota(jnp.int32, (block_rows, LANES), 0)
        valid = (base_row + row_ids) < rows
        d = jnp.abs(yt_ref[...] - yp_ref[...]).astype(jnp.float32)
        fold_and_accumulate(jnp.where(valid, d, jnp.float32(0.0)))

    # blk > last: phantom block from the clamped index map (odd num_blocks);
    # its DMA re-reads a valid tile but it contributes nothing.


def mean_abs_error(y_true: jax.Array, y_pred: jax.Array, rate: float = 1.0):
    """Pallas equivalent of torch.mean(torch.abs(y_true - y_pred)) * rate."""
    assert y_true.shape == y_pred.shape, (y_true.shape, y_pred.shape)
    assert y_true.dtype == y_pred.dtype, (y_true.dtype, y_pred.dtype)
    total_elems = y_true.size
    if total_elems == 0:
        return jnp.float32(0.0)

    itemsize = y_true.dtype.itemsize
    # Packed sublane tile: 8 rows f32, 16 rows bf16, 32 rows int8.
    sub = max(SUBLANES, SUBLANES * (4 // max(itemsize, 1)))
    min_tile = sub * LANES

    # Stream inputs in their native dtype; widen to f32 only at accumulation.
    yt = jnp.ravel(y_true)
    yp = jnp.ravel(y_pred)

    # Zero-copy [rows, 128] view whenever the flat length is lane-aligned and
    # at least one packed tile; otherwise pad minimally with zeros (zeros in
    # both inputs contribute exactly 0 to the |diff| sum).
    if total_elems % LANES != 0 or total_elems < min_tile:
        padded = pl.cdiv(total_elems, min_tile) * min_tile
        yt = jnp.pad(yt, (0, padded - total_elems))
        yp = jnp.pad(yp, (0, padded - total_elems))

    rows = yt.shape[0] // LANES
    yt2 = yt.reshape(rows, LANES)
    yp2 = yp.reshape(rows, LANES)

    # Dtype-aware ~4 MiB per-input tile, rounded to the packed sublane tile.
    budget_rows = max(sub, TILE_BYTES // (LANES * itemsize))
    block_rows = min(budget_rows, rows)
    block_rows = max(sub, (block_rows // sub) * sub)

    # Widened resident accumulator height (must divide block_rows).
    acc_rows = next(a for a in (64, 32, 16, 8) if block_rows % a == 0)

    num_blocks = pl.cdiv(rows, block_rows)
    ncore_chunks = 2 if num_blocks >= 2 else 1
    blocks_per_core = pl.cdiv(num_blocks, ncore_chunks)

    def in_map(c, i):
        # Clamp so the phantom block (odd num_blocks) re-reads a valid tile;
        # its contribution is skipped entirely in-kernel.
        return (jnp.minimum(c * blocks_per_core + i, num_blocks - 1), 0)

    kernel = functools.partial(
        _mae_kernel,
        block_rows=block_rows,
        acc_rows=acc_rows,
        rows=rows,
        num_blocks=num_blocks,
        blocks_per_core=blocks_per_core,
    )

    partials = pl.pallas_call(
        kernel,
        out_shape=jax.ShapeDtypeStruct((ncore_chunks, acc_rows, LANES),
                                       jnp.float32),
        grid_spec=pltpu.PrefetchScalarGridSpec(
            num_scalar_prefetch=0,
            grid=(ncore_chunks, blocks_per_core),
            in_specs=[
                pl.BlockSpec((block_rows, LANES), in_map),
                pl.BlockSpec((block_rows, LANES), in_map),
            ],
            out_specs=pl.BlockSpec((1, acc_rows, LANES),
                                   lambda c, i: (c, 0, 0)),
        ),
        compiler_params=pltpu.CompilerParams(
            dimension_semantics=("parallel", "arbitrary"),
            vmem_limit_bytes=VMEM_LIMIT_BYTES,
        ),
    )(yt2, yp2)

    # One tiny final cross-lane/sublane reduce (<= 2 * 64 * 128 floats).
    return (jnp.sum(partials) / jnp.float32(total_elems)) * jnp.float32(rate)


if __name__ == "__main__":
    key = jax.random.PRNGKey(0)
    k1, k2 = jax.random.split(key)
    shape = (2, 4, 16, 16)  # NCHW, as the PyTorch module would receive
    y_true = jax.random.normal(k1, shape, dtype=jnp.float32)
    y_pred = jax.random.normal(k2, shape, dtype=jnp.float32)

    result = mean_abs_error(y_true, y_pred)
    jax.block_until_ready(result)

    # Sanity check against plain-JAX reference.
    ref = jnp.mean(jnp.abs(y_true - y_pred))
    assert jnp.allclose(result, ref, rtol=1e-5, atol=1e-6), (result, ref)

    print("KERNEL_OK")
</pallas_src>

<mosaic_0001>
module attributes {stable_mosaic.version = 11 : i64} {
  func.func @_mae_kernel(%arg0: i32, %arg1: i32, %arg2: memref<16x128xf32, #tpu.memory_space<vmem>>, %arg3: memref<16x128xf32, #tpu.memory_space<vmem>>, %arg4: memref<1x16x128xf32, #tpu.memory_space<vmem>>) attributes {dimension_semantics = [#tpu.dimension_semantics<parallel>, #tpu.dimension_semantics<arbitrary>], iteration_bounds = array<i64: 1, 1>, scalar_prefetch = 0 : i64, scratch_operands = 0 : i64, tpu.core_type = #tpu.core_type<tc>, window_params = [{transform_indices = @transform_0, window_bounds = array<i64: 16, 128>}, {transform_indices = @transform_1, window_bounds = array<i64: 16, 128>}, {transform_indices = @transform_2, window_bounds = array<i64: 1, 16, 128>}]} {
    %c1_i32 = arith.constant 1 : i32
    %0 = arith.muli %arg0, %c1_i32 : i32
    %1 = arith.addi %0, %arg1 : i32
    %c0_i32 = arith.constant 0 : i32
    %2 = arith.cmpi eq, %arg1, %c0_i32 : i32
    %3 = arith.extui %2 : i1 to i32
    %c0_i32_0 = arith.constant 0 : i32
    %4 = arith.cmpi ne, %3, %c0_i32_0 : i32
    scf.if %4 {
      %cst = arith.constant 0.000000e+00 : f32
      %11 = vector.broadcast %cst : f32 to vector<1x16x128xf32>
      %c0 = arith.constant 0 : index
      %c0_5 = arith.constant 0 : index
      %c0_6 = arith.constant 0 : index
      %12 = vector.load %arg4[%c0, %c0_5, %c0_6] : memref<1x16x128xf32, #tpu.memory_space<vmem>>, vector<1x16x128xf32>
      tpu.vector_store %arg4[%c0, %c0_5, %c0_6], %11 {strides = array<i32>} : memref<1x16x128xf32, #tpu.memory_space<vmem>>, vector<1x16x128xf32>,
    } else {
    }
    %c0_i32_1 = arith.constant 0 : i32
    %5 = arith.cmpi slt, %1, %c0_i32_1 : i32
    %6 = arith.extui %5 : i1 to i32
    %c0_i32_2 = arith.constant 0 : i32
    %7 = arith.cmpi ne, %6, %c0_i32_2 : i32
    scf.if %7 {
      %c0 = arith.constant 0 : index
      %c0_5 = arith.constant 0 : index
      %11 = vector.load %arg2[%c0, %c0_5] : memref<16x128xf32, #tpu.memory_space<vmem>>, vector<16x128xf32>
      %c0_6 = arith.constant 0 : index
      %c0_7 = arith.constant 0 : index
      %12 = vector.load %arg3[%c0_6, %c0_7] : memref<16x128xf32, #tpu.memory_space<vmem>>, vector<16x128xf32>
      %13 = arith.subf %11, %12 : vector<16x128xf32>
      %14 = math.absf %13 : vector<16x128xf32>
      %c0_8 = arith.constant 0 : index
      %c0_9 = arith.constant 0 : index
      %c0_10 = arith.constant 0 : index
      %15 = vector.load %arg4[%c0_8, %c0_9, %c0_10] : memref<1x16x128xf32, #tpu.memory_space<vmem>>, vector<1x16x128xf32>
      %16 = vector.shape_cast %14 : vector<16x128xf32> to vector<1x16x128xf32>
      %17 = arith.addf %15, %16 : vector<1x16x128xf32>
      %c0_11 = arith.constant 0 : index
      %c0_12 = arith.constant 0 : index
      %c0_13 = arith.constant 0 : index
      %18 = vector.load %arg4[%c0_11, %c0_12, %c0_13] : memref<1x16x128xf32, #tpu.memory_space<vmem>>, vector<1x16x128xf32>
      tpu.vector_store %arg4[%c0_11, %c0_12, %c0_13], %17 {strides = array<i32>} : memref<1x16x128xf32, #tpu.memory_space<vmem>>, vector<1x16x128xf32>,
    } else {
    }
    %c0_i32_3 = arith.constant 0 : i32
    %8 = arith.cmpi eq, %1, %c0_i32_3 : i32
    %9 = arith.extui %8 : i1 to i32
    %c0_i32_4 = arith.constant 0 : i32
    %10 = arith.cmpi ne, %9, %c0_i32_4 : i32
    scf.if %10 {
      %c16_i32 = arith.constant 16 : i32
      %11 = arith.muli %1, %c16_i32 : i32
      %12 = tpu.iota {dimensions = array<i32: 0>} : vector<16x128xi32>
      %13 = vector.broadcast %11 : i32 to vector<16x128xi32>
      %14 = arith.addi %13, %12 : vector<16x128xi32>
      %c16_i32_5 = arith.constant 16 : i32
      %15 = vector.broadcast %c16_i32_5 : i32 to vector<16x128xi32>
      %16 = arith.cmpi slt, %14, %15 : vector<16x128xi32>
      %c0 = arith.constant 0 : index
      %c0_6 = arith.constant 0 : index
      %17 = vector.load %arg2[%c0, %c0_6] : memref<16x128xf32, #tpu.memory_space<vmem>>, vector<16x128xf32>
      %c0_7 = arith.constant 0 : index
      %c0_8 = arith.constant 0 : index
      %18 = vector.load %arg3[%c0_7, %c0_8] : memref<16x128xf32, #tpu.memory_space<vmem>>, vector<16x128xf32>
      %19 = arith.subf %17, %18 : vector<16x128xf32>
      %20 = math.absf %19 : vector<16x128xf32>
      %cst = arith.constant 0.000000e+00 : f32
      %21 = vector.broadcast %cst : f32 to vector<16x128xf32>
      %22 = arith.select %16, %20, %21 : vector<16x128xi1>, vector<16x128xf32>
      %c0_9 = arith.constant 0 : index
      %c0_10 = arith.constant 0 : index
      %c0_11 = arith.constant 0 : index
      %23 = vector.load %arg4[%c0_9, %c0_10, %c0_11] : memref<1x16x128xf32, #tpu.memory_space<vmem>>, vector<1x16x128xf32>
      %24 = vector.shape_cast %22 : vector<16x128xf32> to vector<1x16x128xf32>
      %25 = arith.addf %23, %24 : vector<1x16x128xf32>
      %c0_12 = arith.constant 0 : index
      %c0_13 = arith.constant 0 : index
      %c0_14 = arith.constant 0 : index
      %26 = vector.load %arg4[%c0_12, %c0_13, %c0_14] : memref<1x16x128xf32, #tpu.memory_space<vmem>>, vector<1x16x128xf32>
      tpu.vector_store %arg4[%c0_12, %c0_13, %c0_14], %25 {strides = array<i32>} : memref<1x16x128xf32, #tpu.memory_space<vmem>>, vector<1x16x128xf32>,
    } else {
    }
    return
  }
  func.func @transform_0(%arg0: i32, %arg1: i32) -> (i32, i32) {
    %c1_i32 = arith.constant 1 : i32
    %0 = arith.muli %arg0, %c1_i32 : i32
    %1 = arith.addi %0, %arg1 : i32
    %c0_i32 = arith.constant 0 : i32
    %2 = arith.minsi %1, %c0_i32 : i32
    %c0_i32_0 = arith.constant 0 : i32
    %c0_i32_1 = arith.constant 0 : i32
    return %2, %c0_i32_0 : i32, i32
  }
  func.func @transform_1(%arg0: i32, %arg1: i32) -> (i32, i32) {
    %c1_i32 = arith.constant 1 : i32
    %0 = arith.muli %arg0, %c1_i32 : i32
    %1 = arith.addi %0, %arg1 : i32
    %c0_i32 = arith.constant 0 : i32
    %2 = arith.minsi %1, %c0_i32 : i32
    %c0_i32_0 = arith.constant 0 : i32
    %c0_i32_1 = arith.constant 0 : i32
    return %2, %c0_i32_0 : i32, i32
  }
  func.func @transform_2(%arg0: i32, %arg1: i32) -> (i32, i32, i32) {
    %c0_i32 = arith.constant 0 : i32
    %c0_i32_0 = arith.constant 0 : i32
    %c0_i32_1 = arith.constant 0 : i32
    return %arg0, %c0_i32, %c0_i32_0 : i32, i32, i32
  }
}

</mosaic_0001>

<llo_original>
// kernel: tpu_custom_call.1
$region0: #{tpu_custom_call.1}
  #allocation0 [shape = 'u32[]', space=smem, size = 0x4, offset = 0x4, fixed_abs, tag = 'smem constant byte address 0x4 - core index']
  #allocation1 [shape = 'u32[144,128]{1,0:T(1,128)}', space=vmem, size = 0x12000, scoped, tag = 'internal scratch']
  %s0 = inlined_call_operand.hbm [shape: f32[16,128], index: 0, kind: input, shape index: {}]
  %s1 = inlined_call_operand.hbm [shape: f32[16,128], index: 1, kind: input, shape index: {}]
  %s2 = inlined_call_operand.hbm [shape: f32[1,16,128], index: 2, kind: output, shape index: {}]
  %s3 = sld [smem:[#allocation0]]
  $region38: #{tpu_custom_call.1} parent=0
    _
  %s5 = ssub.s32 1, %s3
  %s6 = scalar_select 0, %s5, %s3
  $region1: #{tpu_custom_call.1} parent=0
    #allocation2 [shape = 'u8[8192]{0}', space=vmem, size = 0x2000, scoped, tag = 'input window, operand 0, single buffered']
    #allocation3 [shape = 's32[1]{0}', space=sflag, size = 0x4, scoped, tag = 'scoped memory for tpu_custom_call.1']
    #allocation4 [shape = 's32[1]{0}', space=sflag, size = 0x4, scoped, tag = 'scoped memory for tpu_custom_call.1']
    #allocation5 [shape = 'u8[8192]{0}', space=vmem, size = 0x2000, scoped, tag = 'input window, operand 1, single buffered']
    #allocation6 [shape = 's32[1]{0}', space=sflag, size = 0x4, scoped, tag = 'scoped memory for tpu_custom_call.1']
    #allocation7 [shape = 'u8[8192]{0}', space=vmem, size = 0x2000, scoped, tag = 'output window, operand 0, single buffered']
    %7 = vsyncpa [#allocation3], 0
    %8 = vsyncpa [#allocation6], 0
    %9 = vsyncpa [#allocation4], 0
    // Predicated region
    $region2: #{tpu_custom_call.1} parent=1 // pred_check
      _
    $region3: #{tpu_custom_call.1} parent=1 // pred_check_branch
      %11 = sbr.rel (0) target = $region5
    $region4: #{tpu_custom_call.1} parent=1 // pred_region
      %s12 = sadd.s32 0, 0
      %p13 = scmp.lt.s32.totalorder %s12, 0
      %s14 = scalar_select %p13, %s12, 0
      %s15 = smul.u32 2, %s14
      %s17 = ssub.s32 256, 256
      %18 = vsyncadd [#allocation3], %s17
      %s19 = smul.addr %s15, 128
      %s20 = scalar_lea.hbm %s0, %s19
      %s21 = sshll.u32 [#allocation2], 4
      %s22 = int_to_ptr.vmem [resolvable:$true] %s21
      %27 = dma.hbm_to_vmem [thread:$0]  %s20, 256, %s22, [#allocation3], 128, 128, 8
    $region5: #{tpu_custom_call.1} parent=1 // pred_fallthru
      _
    // Predicated region
    $region6: #{tpu_custom_call.1} parent=1 // pred_check
      _
    $region7: #{tpu_custom_call.1} parent=1 // pred_check_branch
      %29 = sbr.rel (0) target = $region9
    $region8: #{tpu_custom_call.1} parent=1 // pred_region
      %s30 = sadd.s32 0, 0
      %p31 = scmp.lt.s32.totalorder %s30, 0
      %s32 = scalar_select %p31, %s30, 0
      %s33 = smul.u32 2, %s32
      %s35 = ssub.s32 256, 256
      %36 = vsyncadd [#allocation6], %s35
      %s37 = smul.addr %s33, 128
      %s38 = scalar_lea.hbm %s1, %s37
      %s39 = sshll.u32 [#allocation5], 4
      %s40 = int_to_ptr.vmem [resolvable:$true] %s39
      %45 = dma.hbm_to_vmem [thread:$0]  %s38, 256, %s40, [#allocation6], 128, 128, 8
    $region9: #{tpu_custom_call.1} parent=1 // pred_fallthru
      _
    // Predicated region
    $region10: #{tpu_custom_call.1} parent=1 // pred_check
      _
    $region11: #{tpu_custom_call.1} parent=1 // pred_check_branch
      %47 = sbr.rel (0) target = $region13
    $region12: #{tpu_custom_call.1} parent=1 // pred_region
      %48 = dma.done [#allocation3], 256
    $region13: #{tpu_custom_call.1} parent=1 // pred_fallthru
      _
    // Predicated region
    $region14: #{tpu_custom_call.1} parent=1 // pred_check
      _
    $region15: #{tpu_custom_call.1} parent=1 // pred_check_branch
      %50 = sbr.rel (0) target = $region17
    $region16: #{tpu_custom_call.1} parent=1 // pred_region
      %51 = dma.done [#allocation6], 256
    $region17: #{tpu_custom_call.1} parent=1 // pred_fallthru
      _
    %s52 = sadd.s32 0, 0
    %p53 = scmp.lt.s32.totalorder %s52, 0
    %s54 = scalar_select %p53, %s52, 0
    %s55 = smul.u32 2, %s54
    %s56 = sadd.s32 0, 0
    %p57 = scmp.lt.s32.totalorder %s56, 0
    %s58 = scalar_select %p57, %s56, 0
    %s59 = smul.u32 2, %s58
    %s60 = sadd.s32 0, 0
    %p61 = scmp.eq.s32.totalorder 0, 0
    // Predicated region
    $region18: #{tpu_custom_call.1} parent=1 // pred_check
      %p62 = pneg %p61
    $region19: #{tpu_custom_call.1} parent=1 // pred_check_branch
      %64 = sbr.rel (%p62) target = $region21
    $region20: #{tpu_custom_call.1} parent=1 // pred_region
      %65 = vst [vmem:[#allocation7] sm:$0xff] 0.0
      %66 = vst [vmem:[#allocation7 + $0x8] sm:$0xff] 0.0
    $region21: #{tpu_custom_call.1} parent=1 // pred_fallthru
      _
    %p67 = scmp.lt.s32.totalorder %s60, 0
    // Predicated region
    $region22: #{tpu_custom_call.1} parent=1 // pred_check
      %p68 = pneg %p67
    $region23: #{tpu_custom_call.1} parent=1 // pred_check_branch
      %70 = sbr.rel (%p68) target = $region25
    $region24: #{tpu_custom_call.1} parent=1 // pred_region
      %v71 = vld [vmem:[#allocation2] sm:$0xff]
      %v72 = vld [vmem:[#allocation2 + $0x8] sm:$0xff]
      %v73 = vld [vmem:[#allocation5] sm:$0xff]
      %v74 = vld [vmem:[#allocation5 + $0x8] sm:$0xff]
      %v75 = vsub.f32 %v71, %v73
      %v76 = vsub.f32 %v72, %v74
      %v77 = vand.u32 2147483647, %v75
      %v78 = vand.u32 2147483647, %v76
      %v79 = vld [vmem:[#allocation7] sm:$0xff]
      %v80 = vld [vmem:[#allocation7 + $0x8] sm:$0xff]
      %v81 = vadd.f32 %v79, %v77
      %v82 = vadd.f32 %v80, %v78
      %83 = vst [vmem:[#allocation7] sm:$0xff] %v81
      %84 = vst [vmem:[#allocation7 + $0x8] sm:$0xff] %v82
    $region25: #{tpu_custom_call.1} parent=1 // pred_fallthru
      _
    %p85 = scmp.eq.s32.totalorder %s60, 0
    // Predicated region
    $region26: #{tpu_custom_call.1} parent=1 // pred_check
      %p86 = pneg %p85
    $region27: #{tpu_custom_call.1} parent=1 // pred_check_branch
      %88 = sbr.rel (%p86) target = $region29
    $region28: #{tpu_custom_call.1} parent=1 // pred_region
      %s89 = smul.u32 %s60, 16
      %v90 = vlaneseq
      %v91 = vshrl.u32 %v90, 7
      %v92 = vadd.s32 %v91, 8
      %v93 = vstv %s89
      %v94 = vadd.s32 %v93, %v91
      %v95 = vadd.s32 %v93, %v92
      %vm96 = vcmp.lt.s32.totalorder %v94, 16
      %vm97 = vcmp.lt.s32.totalorder %v95, 16
      %v98 = vld [vmem:[#allocation2] sm:$0xff]
      %v99 = vld [vmem:[#allocation2 + $0x8] sm:$0xff]
      %v100 = vld [vmem:[#allocation5] sm:$0xff]
      %v101 = vld [vmem:[#allocation5 + $0x8] sm:$0xff]
      %v102 = vsub.f32 %v98, %v100
      %v103 = vsub.f32 %v99, %v101
      %v104 = vand.u32 2147483647, %v102
      %v105 = vand.u32 2147483647, %v103
      %v106 = vsel %vm96, %v104, 0.0
      %v107 = vsel %vm97, %v105, 0.0
      %v108 = vld [vmem:[#allocation7] sm:$0xff]
      %v109 = vld [vmem:[#allocation7 + $0x8] sm:$0xff]
      %v110 = vadd.f32 %v108, %v106
      %v111 = vadd.f32 %v109, %v107
      %112 = vst [vmem:[#allocation7] sm:$0xff] %v110
      %113 = vst [vmem:[#allocation7 + $0x8] sm:$0xff] %v111
    $region29: #{tpu_custom_call.1} parent=1 // pred_fallthru
      _
    // Predicated region
    $region30: #{tpu_custom_call.1} parent=1 // pred_check
      _
    $region31: #{tpu_custom_call.1} parent=1 // pred_check_branch
      %115 = sbr.rel (0) target = $region33
    $region32: #{tpu_custom_call.1} parent=1 // pred_region
      %s117 = ssub.s32 256, 256
      %118 = vsyncadd [#allocation4], %s117
      %s119 = sshll.u32 [#allocation7], 4
      %s120 = int_to_ptr.vmem [resolvable:$true] %s119
      %125 = dma.vmem_to_hbm [thread:$0]  %s120, 256, %s2, [#allocation4], 128, 128, 8
    $region33: #{tpu_custom_call.1} parent=1 // pred_fallthru
      _
    // Predicated region
    $region34: #{tpu_custom_call.1} parent=1 // pred_check
      _
    $region35: #{tpu_custom_call.1} parent=1 // pred_check_branch
      %127 = sbr.rel (0) target = $region37
    $region36: #{tpu_custom_call.1} parent=1 // pred_region
      %128 = dma.done [#allocation4], 256
    $region37: #{tpu_custom_call.1} parent=1 // pred_fallthru
      _
    %129 = vsyncpa [#allocation3], 1
    %130 = vsyncpa [#allocation6], 1
    %131 = vsyncpa [#allocation4], 1

</llo_original>
